<compile_context>
chip_gen: v7x
topology: tpu7x:2x2x1
jax: 0.10.0
libtpu: 0.0.40
codegen_flags: <defaults>
</compile_context>

<pallas_src>
import functools

import jax
import jax.numpy as jnp
from jax.experimental import pallas as pl
from jax.experimental.pallas import tpu as pltpu


# ---------------------------------------------------------------------------
# Kernel
# ---------------------------------------------------------------------------
def _gru_encoder_kernel(normalize_z, d_hidden,
                        x_ref, h_ref,
                        w1_ref, b1_ref,
                        wi_ref, wh_ref, bg_ref,
                        w2_ref, b2_ref,
                        z_out_ref, h_out_ref):
    f32 = jnp.float32
    H = d_hidden

    x = x_ref[...]
    h = h_ref[...]

    # fc1 + ReLU
    x1 = jnp.dot(x, w1_ref[...], preferred_element_type=f32) + b1_ref[...]
    x1 = jnp.maximum(x1, 0.0)

    # Fused GRU gates: g columns are [r_pre | z_pre | gi_n | gh_n]  -> (B, 4H)
    g = (jnp.dot(x1, wi_ref[...], preferred_element_type=f32)
         + jnp.dot(h, wh_ref[...], preferred_element_type=f32)
         + bg_ref[...])

    r = jax.nn.sigmoid(g[:, 0:H])
    zg = jax.nn.sigmoid(g[:, H:2 * H])
    n = jnp.tanh(g[:, 2 * H:3 * H] + r * g[:, 3 * H:4 * H])
    h_new = (1.0 - zg) * n + zg * h

    # fc2
    z = jnp.dot(h_new, w2_ref[...], preferred_element_type=f32) + b2_ref[...]

    if normalize_z:
        # F.normalize(z, p=2, dim=1): z / max(||z||_2, 1e-12)
        # == z * rsqrt(max(sum_sq, 1e-24))   (rsqrt lowers to the EUP slot)
        sum_sq = jnp.sum(z * z, axis=1, keepdims=True)
        z = z * jax.lax.rsqrt(jnp.maximum(sum_sq, 1e-24))

    z_out_ref[...] = z.astype(z_out_ref.dtype)
    h_out_ref[...] = h_new.astype(h_out_ref.dtype)


# ---------------------------------------------------------------------------
# One-time parameter preparation (hoisted out of the per-call path)
# ---------------------------------------------------------------------------
def prepare_gru_encoder_params(params):
    """Pre-transpose / fuse PyTorch-layout params into kernel-ready arrays.

    PyTorch layout in:
      w1   (d_hidden, d_input),  b1   (d_hidden,)
      w_ih (3H, H), w_hh (3H, H), b_ih (3H,), b_hh (3H,)   gate order r, z, n
      w2   (d_output, d_hidden), b2   (d_output,)
    """
    H = params["w_hh"].shape[1]
    f32 = jnp.float32

    w1_t = params["w1"].T.astype(f32)                       # (d_input, H)
    b1 = params["b1"].reshape(1, -1).astype(f32)            # (1, H)

    w_ih_t = params["w_ih"].T.astype(f32)                   # (H, 3H)
    w_hh_t = params["w_hh"].T.astype(f32)                   # (H, 3H)
    zeros_h = jnp.zeros((H, H), f32)

    # Columns: [r | z | n_input | n_hidden]  -> (H, 4H)
    wi_big = jnp.concatenate(
        [w_ih_t[:, 0:H], w_ih_t[:, H:2 * H], w_ih_t[:, 2 * H:3 * H], zeros_h],
        axis=1)
    wh_big = jnp.concatenate(
        [w_hh_t[:, 0:H], w_hh_t[:, H:2 * H], zeros_h, w_hh_t[:, 2 * H:3 * H]],
        axis=1)

    b_ih = params["b_ih"].astype(f32)
    b_hh = params["b_hh"].astype(f32)
    b_big = jnp.concatenate(
        [b_ih[0:H] + b_hh[0:H],          # r
         b_ih[H:2 * H] + b_hh[H:2 * H],  # z
         b_ih[2 * H:3 * H],              # gi_n
         b_hh[2 * H:3 * H]],             # gh_n (kept separate: r * (gh_n))
        axis=0).reshape(1, 4 * H)

    w2_t = params["w2"].T.astype(f32)                        # (H, d_output)
    b2 = params["b2"].reshape(1, -1).astype(f32)             # (1, d_output)

    return {
        "w1_t": w1_t, "b1": b1,
        "wi_big": wi_big, "wh_big": wh_big, "b_big": b_big,
        "w2_t": w2_t, "b2": b2,
        "d_hidden": H,
    }


# ---------------------------------------------------------------------------
# Forward wrapper
# ---------------------------------------------------------------------------
@functools.partial(jax.jit, static_argnames=("normalize_z",))
def gru_encoder_forward(inputs, hidden_state, prepped, *, normalize_z=True):
    """(B, d_input), (B, d_hidden) -> ((B, d_output), (B, d_hidden))."""
    B = inputs.shape[0]
    d_hidden = prepped["w1_t"].shape[1]
    d_output = prepped["w2_t"].shape[1]

    h_in = hidden_state.reshape(-1, d_hidden)

    args = (inputs, h_in,
            prepped["w1_t"], prepped["b1"],
            prepped["wi_big"], prepped["wh_big"], prepped["b_big"],
            prepped["w2_t"], prepped["b2"])

    vmem_spec = pl.BlockSpec(memory_space=pltpu.MemorySpace.VMEM)
    kernel = functools.partial(_gru_encoder_kernel, normalize_z, d_hidden)

    z, h = pl.pallas_call(
        kernel,
        out_shape=(jax.ShapeDtypeStruct((B, d_output), jnp.float32),
                   jax.ShapeDtypeStruct((B, d_hidden), jnp.float32)),
        in_specs=[vmem_spec] * len(args),
        out_specs=(vmem_spec, vmem_spec),
    )(*args)
    return z, h


# ---------------------------------------------------------------------------
# Test scaffolding
# ---------------------------------------------------------------------------
def _init_params(key, d_input, d_hidden, d_output):
    """Deterministic synthetic params in PyTorch layout / default-style init."""
    ks = jax.random.split(key, 8)
    u = lambda k, shape, bound: jax.random.uniform(
        k, shape, jnp.float32, minval=-bound, maxval=bound)
    b_fc1 = 1.0 / jnp.sqrt(d_input)
    b_rnn = 1.0 / jnp.sqrt(d_hidden)
    b_fc2 = 1.0 / jnp.sqrt(d_hidden)
    return {
        "w1": u(ks[0], (d_hidden, d_input), b_fc1),
        "b1": u(ks[1], (d_hidden,), b_fc1),
        "w_ih": u(ks[2], (3 * d_hidden, d_hidden), b_rnn),
        "w_hh": u(ks[3], (3 * d_hidden, d_hidden), b_rnn),
        "b_ih": u(ks[4], (3 * d_hidden,), b_rnn),
        "b_hh": u(ks[5], (3 * d_hidden,), b_rnn),
        "w2": u(ks[6], (d_output, d_hidden), b_fc2),
        "b2": u(ks[7], (d_output,), b_fc2),
    }


def _reference_forward(inputs, hidden_state, p, normalize_z=True):
    """Plain-JAX reference mirroring the PyTorch module exactly."""
    x1 = jax.nn.relu(inputs @ p["w1"].T + p["b1"])
    H = p["w_hh"].shape[1]
    h = hidden_state.reshape(-1, H)
    gi = x1 @ p["w_ih"].T + p["b_ih"]
    gh = h @ p["w_hh"].T + p["b_hh"]
    r = jax.nn.sigmoid(gi[:, :H] + gh[:, :H])
    zg = jax.nn.sigmoid(gi[:, H:2 * H] + gh[:, H:2 * H])
    n = jnp.tanh(gi[:, 2 * H:] + r * gh[:, 2 * H:])
    h_new = (1.0 - zg) * n + zg * h
    z = h_new @ p["w2"].T + p["b2"]
    if normalize_z:
        z = z / jnp.maximum(jnp.linalg.norm(z, axis=1, keepdims=True), 1e-12)
    return z, h_new


if __name__ == "__main__":
    B, D_INPUT, D_HIDDEN, D_OUTPUT = 8, 16, 32, 32

    key = jax.random.PRNGKey(0)
    k_params, k_x = jax.random.split(key)
    params = _init_params(k_params, D_INPUT, D_HIDDEN, D_OUTPUT)
    prepped = prepare_gru_encoder_params(params)   # one-time prep (hoisted)

    inputs = jax.random.normal(k_x, (B, D_INPUT), jnp.float32)
    hidden_state = jnp.zeros((B, D_HIDDEN), jnp.float32)   # init_hidden(bs)

    z, h = gru_encoder_forward(inputs, hidden_state, prepped, normalize_z=True)
    jax.block_until_ready((z, h))

    z_ref, h_ref = _reference_forward(inputs, hidden_state, params, normalize_z=True)
    assert jnp.allclose(z, z_ref, atol=1e-5, rtol=1e-5), "z mismatch"
    assert jnp.allclose(h, h_ref, atol=1e-5, rtol=1e-5), "h mismatch"

    print("KERNEL_OK")
</pallas_src>

<mosaic_0001>
module attributes {stable_mosaic.version = 11 : i64} {
  func.func @_gru_encoder_kernel(%arg0: memref<8x16xf32, #tpu.memory_space<vmem>>, %arg1: memref<8x32xf32, #tpu.memory_space<vmem>>, %arg2: memref<16x32xf32, #tpu.memory_space<vmem>>, %arg3: memref<1x32xf32, #tpu.memory_space<vmem>>, %arg4: memref<32x128xf32, #tpu.memory_space<vmem>>, %arg5: memref<32x128xf32, #tpu.memory_space<vmem>>, %arg6: memref<1x128xf32, #tpu.memory_space<vmem>>, %arg7: memref<32x32xf32, #tpu.memory_space<vmem>>, %arg8: memref<1x32xf32, #tpu.memory_space<vmem>>, %arg9: memref<8x32xf32, #tpu.memory_space<vmem>>, %arg10: memref<8x32xf32, #tpu.memory_space<vmem>>) attributes {dimension_semantics = [], scalar_prefetch = 0 : i64, scratch_operands = 0 : i64, tpu.core_type = #tpu.core_type<tc>} {
    %c0 = arith.constant 0 : index
    %c0_0 = arith.constant 0 : index
    %0 = vector.load %arg0[%c0, %c0_0] : memref<8x16xf32, #tpu.memory_space<vmem>>, vector<8x16xf32>
    %c0_1 = arith.constant 0 : index
    %c0_2 = arith.constant 0 : index
    %1 = vector.load %arg1[%c0_1, %c0_2] : memref<8x32xf32, #tpu.memory_space<vmem>>, vector<8x32xf32>
    %c0_3 = arith.constant 0 : index
    %c0_4 = arith.constant 0 : index
    %2 = vector.load %arg2[%c0_3, %c0_4] : memref<16x32xf32, #tpu.memory_space<vmem>>, vector<16x32xf32>
    %cst = arith.constant dense<0.000000e+00> : vector<8x32xf32>
    %3 = tpu.matmul %0, %2, %cst {dimension_numbers = #tpu.dot_dimension_numbers<[1], [0], [0], [1], [0, 0, 1, 1], [], []>} : vector<8x16xf32>, vector<16x32xf32>, vector<8x32xf32> -> vector<8x32xf32>
    %c0_5 = arith.constant 0 : index
    %c0_6 = arith.constant 0 : index
    %4 = vector.load %arg3[%c0_5, %c0_6] : memref<1x32xf32, #tpu.memory_space<vmem>>, vector<1x32xf32>
    %5 = vector.broadcast %4 : vector<1x32xf32> to vector<8x32xf32>
    %6 = arith.addf %3, %5 : vector<8x32xf32>
    %cst_7 = arith.constant 0.000000e+00 : f32
    %7 = vector.broadcast %cst_7 : f32 to vector<8x32xf32>
    %8 = arith.maximumf %6, %7 : vector<8x32xf32>
    %c0_8 = arith.constant 0 : index
    %c0_9 = arith.constant 0 : index
    %9 = vector.load %arg4[%c0_8, %c0_9] : memref<32x128xf32, #tpu.memory_space<vmem>>, vector<32x128xf32>
    %cst_10 = arith.constant dense<0.000000e+00> : vector<8x128xf32>
    %10 = tpu.matmul %8, %9, %cst_10 {dimension_numbers = #tpu.dot_dimension_numbers<[1], [0], [0], [1], [0, 0, 1, 1], [], []>} : vector<8x32xf32>, vector<32x128xf32>, vector<8x128xf32> -> vector<8x128xf32>
    %c0_11 = arith.constant 0 : index
    %c0_12 = arith.constant 0 : index
    %11 = vector.load %arg5[%c0_11, %c0_12] : memref<32x128xf32, #tpu.memory_space<vmem>>, vector<32x128xf32>
    %cst_13 = arith.constant dense<0.000000e+00> : vector<8x128xf32>
    %12 = tpu.matmul %1, %11, %cst_13 {dimension_numbers = #tpu.dot_dimension_numbers<[1], [0], [0], [1], [0, 0, 1, 1], [], []>} : vector<8x32xf32>, vector<32x128xf32>, vector<8x128xf32> -> vector<8x128xf32>
    %13 = arith.addf %10, %12 : vector<8x128xf32>
    %c0_14 = arith.constant 0 : index
    %c0_15 = arith.constant 0 : index
    %14 = vector.load %arg6[%c0_14, %c0_15] : memref<1x128xf32, #tpu.memory_space<vmem>>, vector<1x128xf32>
    %15 = vector.broadcast %14 : vector<1x128xf32> to vector<8x128xf32>
    %16 = arith.addf %13, %15 : vector<8x128xf32>
    %17 = vector.extract_strided_slice %16 {offsets = [0, 0], sizes = [8, 32], strides = [1, 1]} : vector<8x128xf32> to vector<8x32xf32>
    %18 = arith.negf %17 : vector<8x32xf32>
    %19 = math.exp %18 : vector<8x32xf32>
    %cst_16 = arith.constant 1.000000e+00 : f32
    %20 = vector.broadcast %cst_16 : f32 to vector<8x32xf32>
    %21 = arith.addf %20, %19 : vector<8x32xf32>
    %22 = arith.divf %20, %21 : vector<8x32xf32>
    %23 = vector.extract_strided_slice %16 {offsets = [0, 32], sizes = [8, 32], strides = [1, 1]} : vector<8x128xf32> to vector<8x32xf32>
    %24 = arith.negf %23 : vector<8x32xf32>
    %25 = math.exp %24 : vector<8x32xf32>
    %cst_17 = arith.constant 1.000000e+00 : f32
    %26 = vector.broadcast %cst_17 : f32 to vector<8x32xf32>
    %27 = arith.addf %26, %25 : vector<8x32xf32>
    %28 = arith.divf %26, %27 : vector<8x32xf32>
    %29 = vector.extract_strided_slice %16 {offsets = [0, 64], sizes = [8, 32], strides = [1, 1]} : vector<8x128xf32> to vector<8x32xf32>
    %30 = vector.extract_strided_slice %16 {offsets = [0, 96], sizes = [8, 32], strides = [1, 1]} : vector<8x128xf32> to vector<8x32xf32>
    %31 = arith.mulf %22, %30 : vector<8x32xf32>
    %32 = arith.addf %29, %31 : vector<8x32xf32>
    %33 = math.tanh %32 : vector<8x32xf32>
    %cst_18 = arith.constant 1.000000e+00 : f32
    %34 = vector.broadcast %cst_18 : f32 to vector<8x32xf32>
    %35 = arith.subf %34, %28 : vector<8x32xf32>
    %36 = arith.mulf %35, %33 : vector<8x32xf32>
    %37 = arith.mulf %28, %1 : vector<8x32xf32>
    %38 = arith.addf %36, %37 : vector<8x32xf32>
    %c0_19 = arith.constant 0 : index
    %c0_20 = arith.constant 0 : index
    %39 = vector.load %arg7[%c0_19, %c0_20] : memref<32x32xf32, #tpu.memory_space<vmem>>, vector<32x32xf32>
    %cst_21 = arith.constant dense<0.000000e+00> : vector<8x32xf32>
    %40 = tpu.matmul %38, %39, %cst_21 {dimension_numbers = #tpu.dot_dimension_numbers<[1], [0], [0], [1], [0, 0, 1, 1], [], []>} : vector<8x32xf32>, vector<32x32xf32>, vector<8x32xf32> -> vector<8x32xf32>
    %c0_22 = arith.constant 0 : index
    %c0_23 = arith.constant 0 : index
    %41 = vector.load %arg8[%c0_22, %c0_23] : memref<1x32xf32, #tpu.memory_space<vmem>>, vector<1x32xf32>
    %42 = vector.broadcast %41 : vector<1x32xf32> to vector<8x32xf32>
    %43 = arith.addf %40, %42 : vector<8x32xf32>
    %44 = arith.mulf %43, %43 : vector<8x32xf32>
    %cst_24 = arith.constant dense<0.000000e+00> : vector<8xf32>
    %45 = vector.multi_reduction <add>, %44, %cst_24 [1] : vector<8x32xf32> to vector<8xf32>
    %46 = vector.shape_cast %45 : vector<8xf32> to vector<8x1xf32>
    %cst_25 = arith.constant 1.000000e-24 : f32
    %47 = vector.broadcast %cst_25 : f32 to vector<8x1xf32>
    %48 = arith.maximumf %46, %47 : vector<8x1xf32>
    %49 = math.rsqrt %48 : vector<8x1xf32>
    %50 = vector.broadcast %49 : vector<8x1xf32> to vector<8x32xf32>
    %51 = arith.mulf %43, %50 : vector<8x32xf32>
    %c0_26 = arith.constant 0 : index
    %c0_27 = arith.constant 0 : index
    %52 = vector.load %arg9[%c0_26, %c0_27] : memref<8x32xf32, #tpu.memory_space<vmem>>, vector<8x32xf32>
    tpu.vector_store %arg9[%c0_26, %c0_27], %51 {strides = array<i32>} : memref<8x32xf32, #tpu.memory_space<vmem>>, vector<8x32xf32>,
    %c0_28 = arith.constant 0 : index
    %c0_29 = arith.constant 0 : index
    %53 = vector.load %arg10[%c0_28, %c0_29] : memref<8x32xf32, #tpu.memory_space<vmem>>, vector<8x32xf32>
    tpu.vector_store %arg10[%c0_28, %c0_29], %38 {strides = array<i32>} : memref<8x32xf32, #tpu.memory_space<vmem>>, vector<8x32xf32>,
    return
  }
}

</mosaic_0001>

<llo_original>
// kernel: gru_encoder_forward.1
$region0: #{gru_encoder_forward.1}
  #allocation0 [shape = 'u32[]', space=smem, size = 0x4, offset = 0x4, fixed_abs, tag = 'smem constant byte address 0x4 - core index']
  #allocation1 [shape = 'u32[144,128]{1,0:T(1,128)}', space=vmem, size = 0x12000, scoped, tag = 'internal scratch']
  %s0 = inlined_call_operand.hbm [shape: f32[8,16], index: 0, kind: input, shape index: {}]
  %s1 = inlined_call_operand.hbm [shape: f32[8,32], index: 1, kind: input, shape index: {}]
  %s2 = inlined_call_operand.vmem [shape: f32[16,32], index: 2, kind: input, shape index: {}]
  %s3 = inlined_call_operand.vmem [shape: f32[1,32], index: 3, kind: input, shape index: {}]
  %s4 = inlined_call_operand.hbm [shape: f32[32,128], index: 4, kind: input, shape index: {}]
  %s5 = inlined_call_operand.hbm [shape: f32[32,128], index: 5, kind: input, shape index: {}]
  %s6 = inlined_call_operand.vmem [shape: f32[1,128], index: 6, kind: input, shape index: {}]
  %s7 = inlined_call_operand.hbm [shape: f32[32,32], index: 7, kind: input, shape index: {}]
  %s8 = inlined_call_operand.hbm [shape: f32[1,32], index: 8, kind: input, shape index: {}]
  %s9 = inlined_call_operand.hbm [shape: f32[8,32], index: 9, kind: output, shape index: {0}]
  %s10 = inlined_call_operand.hbm [shape: f32[8,32], index: 10, kind: output, shape index: {1}]
  %11 = xla_tuple %s9, %s10
  %s12 = sld [smem:[#allocation0]]
  $region78: #{gru_encoder_forward.1} parent=0
    _
  %s14 = ssub.s32 1, %s12
  %s15 = scalar_select 0, %s14, %s12
  $region1: #{gru_encoder_forward.1} parent=0
    #allocation2 [shape = 'u8[4096]{0}', space=vmem, size = 0x1000, scoped, tag = 'input window, operand 0, single buffered']
    #allocation3 [shape = 's32[1]{0}', space=sflag, size = 0x4, scoped, tag = 'scoped memory for gru_encoder_forward.1']
    #allocation4 [shape = 's32[1]{0}', space=sflag, size = 0x4, scoped, tag = 'scoped memory for gru_encoder_forward.1']
    #allocation5 [shape = 'u8[4096]{0}', space=vmem, size = 0x1000, scoped, tag = 'input window, operand 1, single buffered']
    #allocation6 [shape = 's32[1]{0}', space=sflag, size = 0x4, scoped, tag = 'scoped memory for gru_encoder_forward.1']
    #allocation7 [shape = 'u8[16384]{0}', space=vmem, size = 0x4000, scoped, tag = 'input window, operand 4, single buffered']
    #allocation8 [shape = 'u8[16384]{0}', space=vmem, size = 0x4000, scoped, tag = 'input window, operand 5, single buffered']
    #allocation9 [shape = 's32[1]{0}', space=sflag, size = 0x4, scoped, tag = 'scoped memory for gru_encoder_forward.1']
    #allocation10 [shape = 'u8[16384]{0}', space=vmem, size = 0x4000, scoped, tag = 'input window, operand 7, single buffered']
    #allocation11 [shape = 'u8[512]{0}', space=vmem, size = 0x400, scoped, tag = 'input window, operand 8, single buffered']
    #allocation12 [shape = 's32[1]{0}', space=sflag, size = 0x4, scoped, tag = 'scoped memory for gru_encoder_forward.1']
    #allocation13 [shape = 'u8[4096]{0}', space=vmem, size = 0x1000, scoped, tag = 'output window, operand 0, single buffered']
    #allocation14 [shape = 'u8[4096]{0}', space=vmem, size = 0x1000, scoped, tag = 'output window, operand 1, single buffered']
    #allocation15 [shape = 's32[1]{0}', space=sflag, size = 0x4, scoped, tag = 'scoped memory for gru_encoder_forward.1']
    %16 = vsyncpa [#allocation3], 0
    %17 = vsyncpa [#allocation6], 0
    %18 = vsyncpa [#allocation9], 0
    %19 = vsyncpa [#allocation12], 0
    %20 = vsyncpa [#allocation4], 0
    %21 = vsyncpa [#allocation15], 0
    // Predicated region
    $region2: #{gru_encoder_forward.1} parent=1 // pred_check
      _
    $region3: #{gru_encoder_forward.1} parent=1 // pred_check_branch
      %23 = sbr.rel (0) target = $region5
    $region4: #{gru_encoder_forward.1} parent=1 // pred_region
      %s25 = ssub.s32 128, 128
      %26 = vsyncadd [#allocation3], %s25
      %s28 = sshll.u32 [#allocation2], 4
      %s29 = int_to_ptr.vmem [resolvable:$true] %s28
      %31 = dma.hbm_to_vmem [thread:$0]  %s0, 128, %s29, [#allocation3]
    $region5: #{gru_encoder_forward.1} parent=1 // pred_fallthru
      _
    // Predicated region
    $region6: #{gru_encoder_forward.1} parent=1 // pred_check
      _
    $region7: #{gru_encoder_forward.1} parent=1 // pred_check_branch
      %33 = sbr.rel (0) target = $region9
    $region8: #{gru_encoder_forward.1} parent=1 // pred_region
      %s35 = ssub.s32 128, 128
      %36 = vsyncadd [#allocation6], %s35
      %s38 = sshll.u32 [#allocation5], 4
      %s39 = int_to_ptr.vmem [resolvable:$true] %s38
      %41 = dma.hbm_to_vmem [thread:$0]  %s1, 128, %s39, [#allocation6]
    $region9: #{gru_encoder_forward.1} parent=1 // pred_fallthru
      _
    // Predicated region
    $region10: #{gru_encoder_forward.1} parent=1 // pred_check
      _
    $region11: #{gru_encoder_forward.1} parent=1 // pred_check_branch
      %43 = sbr.rel (0) target = $region13
    $region12: #{gru_encoder_forward.1} parent=1 // pred_region
      _
    $region13: #{gru_encoder_forward.1} parent=1 // pred_fallthru
      _
    // Predicated region
    $region14: #{gru_encoder_forward.1} parent=1 // pred_check
      _
    $region15: #{gru_encoder_forward.1} parent=1 // pred_check_branch
      %45 = sbr.rel (0) target = $region17
    $region16: #{gru_encoder_forward.1} parent=1 // pred_region
      _
    $region17: #{gru_encoder_forward.1} parent=1 // pred_fallthru
      _
    // Predicated region
    $region18: #{gru_encoder_forward.1} parent=1 // pred_check
      _
    $region19: #{gru_encoder_forward.1} parent=1 // pred_check_branch
      %47 = sbr.rel (0) target = $region21
    $region20: #{gru_encoder_forward.1} parent=1 // pred_region
      %s49 = ssub.s32 512, 512
      %50 = vsyncadd [#allocation6], %s49
      %s51 = sshll.u32 [#allocation7], 4
      %s52 = int_to_ptr.vmem [resolvable:$true] %s51
      %57 = dma.hbm_to_vmem [thread:$0]  %s4, 512, %s52, [#allocation6], 128, 128, 8
    $region21: #{gru_encoder_forward.1} parent=1 // pred_fallthru
      _
    // Predicated region
    $region22: #{gru_encoder_forward.1} parent=1 // pred_check
      _
    $region23: #{gru_encoder_forward.1} parent=1 // pred_check_branch
      %59 = sbr.rel (0) target = $region25
    $region24: #{gru_encoder_forward.1} parent=1 // pred_region
      %s61 = ssub.s32 512, 512
      %62 = vsyncadd [#allocation9], %s61
      %s63 = sshll.u32 [#allocation8], 4
      %s64 = int_to_ptr.vmem [resolvable:$true] %s63
      %69 = dma.hbm_to_vmem [thread:$0]  %s5, 512, %s64, [#allocation9], 128, 128, 8
    $region25: #{gru_encoder_forward.1} parent=1 // pred_fallthru
      _
    // Predicated region
    $region26: #{gru_encoder_forward.1} parent=1 // pred_check
      _
    $region27: #{gru_encoder_forward.1} parent=1 // pred_check_branch
      %71 = sbr.rel (0) target = $region29
    $region28: #{gru_encoder_forward.1} parent=1 // pred_region
      _
    $region29: #{gru_encoder_forward.1} parent=1 // pred_fallthru
      _
    // Predicated region
    $region30: #{gru_encoder_forward.1} parent=1 // pred_check
      _
    $region31: #{gru_encoder_forward.1} parent=1 // pred_check_branch
      %73 = sbr.rel (0) target = $region33
    $region32: #{gru_encoder_forward.1} parent=1 // pred_region
      %s75 = ssub.s32 512, 512
      %76 = vsyncadd [#allocation9], %s75
      %s77 = sshll.u32 [#allocation10], 4
      %s78 = int_to_ptr.vmem [resolvable:$true] %s77
      %83 = dma.hbm_to_vmem [thread:$0]  %s7, 512, %s78, [#allocation9], 128, 128, 8
    $region33: #{gru_encoder_forward.1} parent=1 // pred_fallthru
      _
    // Predicated region
    $region34: #{gru_encoder_forward.1} parent=1 // pred_check
      _
    $region35: #{gru_encoder_forward.1} parent=1 // pred_check_branch
      %85 = sbr.rel (0) target = $region37
    $region36: #{gru_encoder_forward.1} parent=1 // pred_region
      %s87 = ssub.s32 16, 16
      %88 = vsyncadd [#allocation12], %s87
      %s90 = sshll.u32 [#allocation11], 4
      %s91 = int_to_ptr.vmem [resolvable:$true] %s90
      %93 = dma.hbm_to_vmem [thread:$0]  %s8, 16, %s91, [#allocation12]
    $region37: #{gru_encoder_forward.1} parent=1 // pred_fallthru
      _
    // Predicated region
    $region38: #{gru_encoder_forward.1} parent=1 // pred_check
      _
    $region39: #{gru_encoder_forward.1} parent=1 // pred_check_branch
      %95 = sbr.rel (0) target = $region41
    $region40: #{gru_encoder_forward.1} parent=1 // pred_region
      %96 = dma.done [#allocation3], 128
    $region41: #{gru_encoder_forward.1} parent=1 // pred_fallthru
      _
    // Predicated region
    $region42: #{gru_encoder_forward.1} parent=1 // pred_check
      _
    $region43: #{gru_encoder_forward.1} parent=1 // pred_check_branch
      %98 = sbr.rel (0) target = $region45
    $region44: #{gru_encoder_forward.1} parent=1 // pred_region
      %99 = dma.done [#allocation6], 128
    $region45: #{gru_encoder_forward.1} parent=1 // pred_fallthru
      _
    // Predicated region
    $region46: #{gru_encoder_forward.1} parent=1 // pred_check
      _
    $region47: #{gru_encoder_forward.1} parent=1 // pred_check_branch
      %101 = sbr.rel (0) target = $region49
    $region48: #{gru_encoder_forward.1} parent=1 // pred_region
      %102 = dma.done [#allocation6], 512
    $region49: #{gru_encoder_forward.1} parent=1 // pred_fallthru
      _
    // Predicated region
    $region50: #{gru_encoder_forward.1} parent=1 // pred_check
      _
    $region51: #{gru_encoder_forward.1} parent=1 // pred_check_branch
      %104 = sbr.rel (0) target = $region53
    $region52: #{gru_encoder_forward.1} parent=1 // pred_region
      %105 = dma.done [#allocation9], 512
    $region53: #{gru_encoder_forward.1} parent=1 // pred_fallthru
      _
    // Predicated region
    $region54: #{gru_encoder_forward.1} parent=1 // pred_check
      _
    $region55: #{gru_encoder_forward.1} parent=1 // pred_check_branch
      %107 = sbr.rel (0) target = $region57
    $region56: #{gru_encoder_forward.1} parent=1 // pred_region
      %108 = dma.done [#allocation9], 512
    $region57: #{gru_encoder_forward.1} parent=1 // pred_fallthru
      _
    // Predicated region
    $region58: #{gru_encoder_forward.1} parent=1 // pred_check
      _
    $region59: #{gru_encoder_forward.1} parent=1 // pred_check_branch
      %110 = sbr.rel (0) target = $region61
    $region60: #{gru_encoder_forward.1} parent=1 // pred_region
      %111 = dma.done [#allocation12], 16
    $region61: #{gru_encoder_forward.1} parent=1 // pred_fallthru
      _
    %v112 = vld [vmem:[#allocation2] sm:$0xff]
    %v113 = vld [vmem:[#allocation5] sm:$0xff]
    %v114 = vld [vmem:[%s2] sm:$0xff]
    %v115 = vld [vmem:[%s2 + $0x8] sm:$0xff]
    %v116 = vld [vmem:[%s3] sm:$0x1]
    %v118 = vlaneseq
    %v119 = vshrl.u32 %v118, 7
    %v120 = vsub.s32 0, %v119
    %v121 = vrot.slane %v116, %v120
    %vm123 = vcmask 130048
    %v125 = vsel %vm123, %v112, 0
    %127 = vmatprep.subr.mxu0 0.0
    %128 = vmatpush1.msra.mxu0 %v114
    %129 = vmatprep.subr.mxu0 0.0
    %130 = vmatpush1.msra.mxu0 %v115
    %131 = vmatprep.subr.mxu0 0.0
    %132 = vmatpush1.msra.mxu0 0.0
    %133 = vmatprep.subr.mxu0 0.0
    %134 = vmatpush1.msra.mxu0 0.0
    %135 = vmatprep.subr.mxu0 0.0
    %136 = vmatpush1.msra.mxu0 0.0
    %137 = vmatprep.subr.mxu0 0.0
    %138 = vmatpush1.msra.mxu0 0.0
    %139 = vmatprep.subr.mxu0 0.0
    %140 = vmatpush1.msra.mxu0 0.0
    %141 = vmatprep.subr.mxu0 0.0
    %142 = vmatpush1.msra.mxu0 0.0
    %143 = vmatprep.subr.mxu0 0.0
    %144 = vmatpush1.msra.mxu0 0.0
    %145 = vmatprep.subr.mxu0 0.0
    %146 = vmatpush1.msra.mxu0 0.0
    %147 = vmatprep.subr.mxu0 0.0
    %148 = vmatpush1.msra.mxu0 0.0
    %149 = vmatprep.subr.mxu0 0.0
    %150 = vmatpush1.msra.mxu0 0.0
    %151 = vmatprep.subr.mxu0 0.0
    %152 = vmatpush1.msra.mxu0 0.0
    %153 = vmatprep.subr.mxu0 0.0
    %154 = vmatpush1.msra.mxu0 0.0
    %155 = vmatprep.subr.mxu0 0.0
    %156 = vmatpush1.msra.mxu0 0.0
    %157 = vmatprep.subr.mxu0 0.0
    %158 = vmatpush1.msra.mxu0 0.0
    %159 = vmatprep.subr.mxu0 0.0
    %160 = vmatpush1.msra.mxu0 0.0
    %161 = vmatprep.subr.mxu0 0.0
    %162 = vmatpush1.msra.mxu0 0.0
    %163 = vmatprep.subr.mxu0 0.0
    %164 = vmatpush1.msra.mxu0 0.0
    %165 = vmatprep.subr.mxu0 0.0
    %166 = vmatpush1.msra.mxu0 0.0
    %167 = vmatprep.subr.mxu0 0.0
    %168 = vmatpush1.msra.mxu0 0.0
    %169 = vmatprep.subr.mxu0 0.0
    %170 = vmatpush1.msra.mxu0 0.0
    %171 = vmatprep.subr.mxu0 0.0
    %172 = vmatpush1.msra.mxu0 0.0
    %173 = vmatprep.subr.mxu0 0.0
    %174 = vmatpush1.msra.mxu0 0.0
    %175 = vmatprep.subr.mxu0 0.0
    %176 = vmatpush1.msra.mxu0 0.0
    %177 = vmatprep.subr.mxu0 0.0
    %178 = vmatpush1.msra.mxu0 0.0
    %179 = vmatprep.subr.mxu0 0.0
    %180 = vmatpush1.msra.mxu0 0.0
    %181 = vmatprep.subr.mxu0 0.0
    %182 = vmatpush1.msra.mxu0 0.0
    %183 = vmatprep.subr.mxu0 0.0
    %184 = vmatpush1.msra.mxu0 0.0
    %185 = vmatprep.subr.mxu0 0.0
    %186 = vmatpush1.msra.mxu0 0.0
    %187 = vmatprep.subr.mxu0 0.0
    %188 = vmatpush1.msra.mxu0 0.0
    %189 = vmatprep.subr.mxu0 0.0
    %190 = vmatpush1.msra.mxu0 0.0
    %191 = vmatprep.mubr.f32.mxu0 0.0
    %192 = vmatmul.mubr.f32.gmra.mrb[0].mxu0 %v125
    %v193 = vpop.f32.mrb[0].mxu0
    %v194 = vadd.f32 %v121, %v193
    %v195 = vpop.f32.mrb[0].mxu0
    %196 = vdwg.mxu0
    %v197 = vmax.f32 %v194, 0.0
    %v198 = vld [vmem:[#allocation7] sm:$0xff]
    %v199 = vld [vmem:[#allocation7 + $0x8] sm:$0xff]
    %v200 = vld [vmem:[#allocation7 + $0x10] sm:$0xff]
    %v201 = vld [vmem:[#allocation7 + $0x18] sm:$0xff]
    %v202 = vld [vmem:[#allocation8] sm:$0xff]
    %v203 = vld [vmem:[#allocation8 + $0x8] sm:$0xff]
    %v204 = vld [vmem:[#allocation8 + $0x10] sm:$0xff]
    %v205 = vld [vmem:[#allocation8 + $0x18] sm:$0xff]
    %vm206 = vcmask 261120
    %v208 = vsel %vm206, %v113, 0
    %210 = vmatprep.subr.mxu0 0.0
    %211 = vmatpush1.msra.mxu0 %v202
    %212 = vmatprep.subr.mxu0 0.0
    %213 = vmatpush1.msra.mxu0 %v203
    %214 = vmatprep.subr.mxu0 0.0
    %215 = vmatpush1.msra.mxu0 %v204
    %216 = vmatprep.subr.mxu0 0.0
    %217 = vmatpush1.msra.mxu0 %v205
    %218 = vmatprep.subr.mxu0 0.0
    %219 = vmatpush1.msra.mxu0 0.0
    %220 = vmatprep.subr.mxu0 0.0
    %221 = vmatpush1.msra.mxu0 0.0
    %222 = vmatprep.subr.mxu0 0.0
    %223 = vmatpush1.msra.mxu0 0.0
    %224 = vmatprep.subr.mxu0 0.0
    %225 = vmatpush1.msra.mxu0 0.0
    %226 = vmatprep.subr.mxu0 0.0
    %227 = vmatpush1.msra.mxu0 0.0
    %228 = vmatprep.subr.mxu0 0.0
    %229 = vmatpush1.msra.mxu0 0.0
    %230 = vmatprep.subr.mxu0 0.0
    %231 = vmatpush1.msra.mxu0 0.0
    %232 = vmatprep.subr.mxu0 0.0
    %233 = vmatpush1.msra.mxu0 0.0
    %234 = vmatprep.subr.mxu0 0.0
    %235 = vmatpush1.msra.mxu0 0.0
    %236 = vmatprep.subr.mxu0 0.0
    %237 = vmatpush1.msra.mxu0 0.0
    %238 = vmatprep.subr.mxu0 0.0
    %239 = vmatpush1.msra.mxu0 0.0
    %240 = vmatprep.subr.mxu0 0.0
    %241 = vmatpush1.msra.mxu0 0.0
    %242 = vmatprep.subr.mxu0 0.0
    %243 = vmatpush1.msra.mxu0 0.0
    %244 = vmatprep.subr.mxu0 0.0
    %245 = vmatpush1.msra.mxu0 0.0
    %246 = vmatprep.subr.mxu0 0.0
    %247 = vmatpush1.msra.mxu0 0.0
    %248 = vmatprep.subr.mxu0 0.0
    %249 = vmatpush1.msra.mxu0 0.0
    %250 = vmatprep.subr.mxu0 0.0
    %251 = vmatpush1.msra.mxu0 0.0
    %252 = vmatprep.subr.mxu0 0.0
    %253 = vmatpush1.msra.mxu0 0.0
    %254 = vmatprep.subr.mxu0 0.0
    %255 = vmatpush1.msra.mxu0 0.0
    %256 = vmatprep.subr.mxu0 0.0
    %257 = vmatpush1.msra.mxu0 0.0
    %258 = vmatprep.subr.mxu0 0.0
    %259 = vmatpush1.msra.mxu0 0.0
    %260 = vmatprep.subr.mxu0 0.0
    %261 = vmatpush1.msra.mxu0 0.0
    %262 = vmatprep.subr.mxu0 0.0
    %263 = vmatpush1.msra.mxu0 0.0
    %264 = vmatprep.subr.mxu0 0.0
    %265 = vmatpush1.msra.mxu0 0.0
    %266 = vmatprep.subr.mxu0 0.0
    %267 = vmatpush1.msra.mxu0 0.0
    %268 = vmatprep.subr.mxu0 0.0
    %269 = vmatpush1.msra.mxu0 0.0
    %270 = vmatprep.subr.mxu0 0.0
    %271 = vmatpush1.msra.mxu0 0.0
    %272 = vmatprep.subr.mxu0 0.0
    %273 = vmatpush1.msra.mxu0 0.0
    %274 = vmatprep.mubr.f32.mxu0 0.0
    %275 = vmatmul.mubr.f32.gmra.mrb[0].mxu0 %v208
    %v276 = vpop.f32.mrb[0].mxu0
    %v277 = vadd.f32 0.0, %v276
    %v278 = vpop.f32.mrb[0].mxu0
    %279 = vdwg.mxu0
    %v281 = vsel %vm206, %v197, 0
    %283 = vmatprep.subr.mxu0 0.0
    %284 = vmatpush1.msra.mxu0 %v198
    %285 = vmatprep.subr.mxu0 0.0
    %286 = vmatpush1.msra.mxu0 %v199
    %287 = vmatprep.subr.mxu0 0.0
    %288 = vmatpush1.msra.mxu0 %v200
    %289 = vmatprep.subr.mxu0 0.0
    %290 = vmatpush1.msra.mxu0 %v201
    %291 = vmatprep.subr.mxu0 0.0
    %292 = vmatpush1.msra.mxu0 0.0
    %293 = vmatprep.subr.mxu0 0.0
    %294 = vmatpush1.msra.mxu0 0.0
    %295 = vmatprep.subr.mxu0 0.0
    %296 = vmatpush1.msra.mxu0 0.0
    %297 = vmatprep.subr.mxu0 0.0
    %298 = vmatpush1.msra.mxu0 0.0
    %299 = vmatprep.subr.mxu0 0.0
    %300 = vmatpush1.msra.mxu0 0.0
    %301 = vmatprep.subr.mxu0 0.0
    %302 = vmatpush1.msra.mxu0 0.0
    %303 = vmatprep.subr.mxu0 0.0
    %304 = vmatpush1.msra.mxu0 0.0
    %305 = vmatprep.subr.mxu0 0.0
    %306 = vmatpush1.msra.mxu0 0.0
    %307 = vmatprep.subr.mxu0 0.0
    %308 = vmatpush1.msra.mxu0 0.0
    %309 = vmatprep.subr.mxu0 0.0
    %310 = vmatpush1.msra.mxu0 0.0
    %311 = vmatprep.subr.mxu0 0.0
    %312 = vmatpush1.msra.mxu0 0.0
    %313 = vmatprep.subr.mxu0 0.0
    %314 = vmatpush1.msra.mxu0 0.0
    %315 = vmatprep.subr.mxu0 0.0
    %316 = vmatpush1.msra.mxu0 0.0
    %317 = vmatprep.subr.mxu0 0.0
    %318 = vmatpush1.msra.mxu0 0.0
    %319 = vmatprep.subr.mxu0 0.0
    %320 = vmatpush1.msra.mxu0 0.0
    %321 = vmatprep.subr.mxu0 0.0
    %322 = vmatpush1.msra.mxu0 0.0
    %323 = vmatprep.subr.mxu0 0.0
    %324 = vmatpush1.msra.mxu0 0.0
    %325 = vmatprep.subr.mxu0 0.0
    %326 = vmatpush1.msra.mxu0 0.0
    %327 = vmatprep.subr.mxu0 0.0
    %328 = vmatpush1.msra.mxu0 0.0
    %329 = vmatprep.subr.mxu0 0.0
    %330 = vmatpush1.msra.mxu0 0.0
    %331 = vmatprep.subr.mxu0 0.0
    %332 = vmatpush1.msra.mxu0 0.0
    %333 = vmatprep.subr.mxu0 0.0
    %334 = vmatpush1.msra.mxu0 0.0
    %335 = vmatprep.subr.mxu0 0.0
    %336 = vmatpush1.msra.mxu0 0.0
    %337 = vmatprep.subr.mxu0 0.0
    %338 = vmatpush1.msra.mxu0 0.0
    %339 = vmatprep.subr.mxu0 0.0
    %340 = vmatpush1.msra.mxu0 0.0
    %341 = vmatprep.subr.mxu0 0.0
    %342 = vmatpush1.msra.mxu0 0.0
    %343 = vmatprep.subr.mxu0 0.0
    %344 = vmatpush1.msra.mxu0 0.0
    %345 = vmatprep.subr.mxu0 0.0
    %346 = vmatpush1.msra.mxu0 0.0
    %347 = vmatprep.mubr.f32.mxu0 0.0
    %348 = vmatmul.mubr.f32.gmra.mrb[0].mxu0 %v281
    %v349 = vpop.f32.mrb[0].mxu0
    %v350 = vadd.f32 %v277, %v349
    %v351 = vpop.f32.mrb[0].mxu0
    %352 = vdwg.mxu0
    %v353 = vld [vmem:[%s6] sm:$0x1]
    %v355 = vlaneseq
    %v356 = vshrl.u32 %v355, 7
    %v357 = vsub.s32 0, %v356
    %v358 = vrot.slane %v353, %v357
    %v360 = vadd.f32 %v350, %v358
    %v361 = vxor.u32 %v360, 2147483648
    %v362 = vmul.f32 %v361, 1.442695
    %v363 = vpow.pop %v362
    %v364 = vadd.f32 %v363, 1.0
    %v365 = vrcp.pop %v364
    %v366 = vmul.f32 1.0, %v365
    %368 = vrot.lane.b32.xlu0 %v360, 32
    %v369 = vpop.permute.xlu0 %368
    %v371 = vmul.f32 %v366, %v369
    %373 = vrot.lane.b32.xlu0 %v371, 64
    %v374 = vpop.permute.xlu0 %373
    %v376 = vadd.f32 %v360, %v374
    %v377 = vtanh.pop %v376
    %v378 = vsub.f32 1.0, %v366
    %380 = vrot.lane.b32.xlu0 %v377, 96
    %v381 = vpop.permute.xlu0 %380
    %v383 = vmul.f32 %v378, %v381
    %384 = vrot.lane.b32.xlu0 %v113, 32
    %v385 = vpop.permute.xlu0 %384
    %v387 = vmul.f32 %v366, %v385
    %v388 = vadd.f32 %v383, %v387
    %v389 = vld [vmem:[#allocation10] sm:$0xff]
    %v390 = vld [vmem:[#allocation10 + $0x8] sm:$0xff]
    %v391 = vld [vmem:[#allocation10 + $0x10] sm:$0xff]
    %v392 = vld [vmem:[#allocation10 + $0x18] sm:$0xff]
    %v393 = vld [vmem:[#allocation11] sm:$0x1]
    %v395 = vlaneseq
    %v396 = vshrl.u32 %v395, 7
    %v397 = vsub.s32 0, %v396
    %v398 = vrot.slane %v393, %v397
    %401 = vrot.lane.b32.xlu0 %v388, 96
    %v402 = vpop.permute.xlu0 %401
    %v403 = vsel %vm206, %v402, 0
    %405 = vmatprep.subr.mxu0 0.0
    %406 = vmatpush1.msra.mxu0 %v389
    %407 = vmatprep.subr.mxu0 0.0
    %408 = vmatpush1.msra.mxu0 %v390
    %409 = vmatprep.subr.mxu0 0.0
    %410 = vmatpush1.msra.mxu0 %v391
    %411 = vmatprep.subr.mxu0 0.0
    %412 = vmatpush1.msra.mxu0 %v392
    %413 = vmatprep.subr.mxu0 0.0
    %414 = vmatpush1.msra.mxu0 0.0
    %415 = vmatprep.subr.mxu0 0.0
    %416 = vmatpush1.msra.mxu0 0.0
    %417 = vmatprep.subr.mxu0 0.0
    %418 = vmatpush1.msra.mxu0 0.0
    %419 = vmatprep.subr.mxu0 0.0
    %420 = vmatpush1.msra.mxu0 0.0
    %421 = vmatprep.subr.mxu0 0.0
    %422 = vmatpush1.msra.mxu0 0.0
    %423 = vmatprep.subr.mxu0 0.0
    %424 = vmatpush1.msra.mxu0 0.0
    %425 = vmatprep.subr.mxu0 0.0
    %426 = vmatpush1.msra.mxu0 0.0
    %427 = vmatprep.subr.mxu0 0.0
    %428 = vmatpush1.msra.mxu0 0.0
    %429 = vmatprep.subr.mxu0 0.0
    %430 = vmatpush1.msra.mxu0 0.0
    %431 = vmatprep.subr.mxu0 0.0
    %432 = vmatpush1.msra.mxu0 0.0
    %433 = vmatprep.subr.mxu0 0.0
    %434 = vmatpush1.msra.mxu0 0.0
    %435 = vmatprep.subr.mxu0 0.0
    %436 = vmatpush1.msra.mxu0 0.0
    %437 = vmatprep.subr.mxu0 0.0
    %438 = vmatpush1.msra.mxu0 0.0
    %439 = vmatprep.subr.mxu0 0.0
    %440 = vmatpush1.msra.mxu0 0.0
    %441 = vmatprep.subr.mxu0 0.0
    %442 = vmatpush1.msra.mxu0 0.0
    %443 = vmatprep.subr.mxu0 0.0
    %444 = vmatpush1.msra.mxu0 0.0
    %445 = vmatprep.subr.mxu0 0.0
    %446 = vmatpush1.msra.mxu0 0.0
    %447 = vmatprep.subr.mxu0 0.0
    %448 = vmatpush1.msra.mxu0 0.0
    %449 = vmatprep.subr.mxu0 0.0
    %450 = vmatpush1.msra.mxu0 0.0
    %451 = vmatprep.subr.mxu0 0.0
    %452 = vmatpush1.msra.mxu0 0.0
    %453 = vmatprep.subr.mxu0 0.0
    %454 = vmatpush1.msra.mxu0 0.0
    %455 = vmatprep.subr.mxu0 0.0
    %456 = vmatpush1.msra.mxu0 0.0
    %457 = vmatprep.subr.mxu0 0.0
    %458 = vmatpush1.msra.mxu0 0.0
    %459 = vmatprep.subr.mxu0 0.0
    %460 = vmatpush1.msra.mxu0 0.0
    %461 = vmatprep.subr.mxu0 0.0
    %462 = vmatpush1.msra.mxu0 0.0
    %463 = vmatprep.subr.mxu0 0.0
    %464 = vmatpush1.msra.mxu0 0.0
    %465 = vmatprep.subr.mxu0 0.0
    %466 = vmatpush1.msra.mxu0 0.0
    %467 = vmatprep.subr.mxu0 0.0
    %468 = vmatpush1.msra.mxu0 0.0
    %469 = vmatprep.mubr.f32.mxu0 0.0
    %470 = vmatmul.mubr.f32.gmra.mrb[0].mxu0 %v403
    %v471 = vpop.f32.mrb[0].mxu0
    %v472 = vadd.f32 %v398, %v471
    %v473 = vpop.f32.mrb[0].mxu0
    %474 = vdwg.mxu0
    %v475 = vmul.f32 %v472, %v472
    %v476 = vsel %vm206, %v475, 0.0
    %477 = vadd.xlane.f32.xlu0 %v476
    %v478 = vpop.xlane.xlu0 %477
    %v479 = vmax.f32 %v478, 1e-24
    %v480 = vrsqrt.pop %v479
    %v481 = vmul.f32 %v472, %v480
    %482 = vst.msk [vmem:[#allocation13] sm:$0xff] %vm206, %v481
    %484 = vst.msk [vmem:[#allocation14] sm:$0xff] %vm206, %v402
    // Predicated region
    $region62: #{gru_encoder_forward.1} parent=1 // pred_check
      _
    $region63: #{gru_encoder_forward.1} parent=1 // pred_check_branch
      %486 = sbr.rel (0) target = $region65
    $region64: #{gru_encoder_forward.1} parent=1 // pred_region
      %s488 = ssub.s32 128, 128
      %489 = vsyncadd [#allocation4], %s488
      %s491 = sshll.u32 [#allocation13], 4
      %s492 = int_to_ptr.vmem [resolvable:$true] %s491
      %494 = dma.vmem_to_hbm [thread:$0]  %s492, 128, %s9, [#allocation4]
    $region65: #{gru_encoder_forward.1} parent=1 // pred_fallthru
      _
    // Predicated region
    $region66: #{gru_encoder_forward.1} parent=1 // pred_check
      _
    $region67: #{gru_encoder_forward.1} parent=1 // pred_check_branch
      %496 = sbr.rel (0) target = $region69
    $region68: #{gru_encoder_forward.1} parent=1 // pred_region
      %s498 = ssub.s32 128, 128
      %499 = vsyncadd [#allocation15], %s498
      %s501 = sshll.u32 [#allocation14], 4
      %s502 = int_to_ptr.vmem [resolvable:$true] %s501
      %504 = dma.vmem_to_hbm [thread:$0]  %s502, 128, %s10, [#allocation15]
    $region69: #{gru_encoder_forward.1} parent=1 // pred_fallthru
      _
    // Predicated region
    $region70: #{gru_encoder_forward.1} parent=1 // pred_check
      _
    $region71: #{gru_encoder_forward.1} parent=1 // pred_check_branch
      %506 = sbr.rel (0) target = $region73
    $region72: #{gru_encoder_forward.1} parent=1 // pred_region
      %507 = dma.done [#allocation4], 128
    $region73: #{gru_encoder_forward.1} parent=1 // pred_fallthru
      _
    // Predicated region
    $region74: #{gru_encoder_forward.1} parent=1 // pred_check
      _
    $region75: #{gru_encoder_forward.1} parent=1 // pred_check_branch
      %509 = sbr.rel (0) target = $region77
    $region76: #{gru_encoder_forward.1} parent=1 // pred_region
      %510 = dma.done [#allocation15], 128
    $region77: #{gru_encoder_forward.1} parent=1 // pred_fallthru
      _
    %511 = vsyncpa [#allocation3], 1
    %512 = vsyncpa [#allocation6], 1
    %513 = vsyncpa [#allocation9], 1
    %514 = vsyncpa [#allocation12], 1
    %515 = vsyncpa [#allocation4], 1
    %516 = vsyncpa [#allocation15], 1

</llo_original>
